<compile_context>
chip_gen: v7x
topology: tpu7x:2x2x1
jax: 0.10.0
libtpu: 0.0.40
codegen_flags: <defaults>
</compile_context>

<pallas_src>
import jax
import jax.numpy as jnp
from jax.experimental import pallas as pl
from jax.experimental.pallas import tpu as pltpu

# ---- module "globals" (config) ------------------------------------------------
convChannel = [4, 8, 16]
convKernel  = [3, 3]
convStride  = [1, 1]
convPadding = [1, 1]
dropoutRate = 0.1
windowSize  = 16
BATCH       = 2


# ---- Pallas kernel: whole forward, fused, single grid step --------------------
def make_fused_kernel(num_blocks):
    def kernel(*refs):
        # refs = (x_ref, [A_even, A_odd, bias_row] * num_blocks, o_ref)
        x_ref, o_ref = refs[0], refs[-1]
        op_refs = refs[1:-1]
        h = x_ref[...]                                     # (N, Cin0*L0) f32
        for i in range(num_blocks):                        # static unroll
            ae = op_refs[3 * i][...]                       # (Cin*L, Cout*Lh)
            ao = op_refs[3 * i + 1][...]                   # (Cin*L, Cout*Lh)
            br = op_refs[3 * i + 2][...]                   # (1, Cout*Lh)
            conv_e = jnp.dot(h, ae, preferred_element_type=jnp.float32)
            conv_o = jnp.dot(h, ao, preferred_element_type=jnp.float32)
            # MaxPool1d(2) == elementwise max of the even/odd conv positions;
            # bias is position-independent so add-after-max == add-before-max.
            h = jnp.maximum(conv_e, conv_o) + br
        o_ref[...] = h.astype(o_ref.dtype)
    return kernel


# ---- parameter init + one-time operator build (outside the per-call path) -----
def init_params(key):
    """Deterministic PyTorch-style (uniform(-1/sqrt(fan_in))) init per Conv1d."""
    params = []
    for i in range(len(convChannel) - 1):
        cin, cout, k = convChannel[i], convChannel[i + 1], convKernel[i]
        key, kw, kb = jax.random.split(key, 3)
        bound = 1.0 / (cin * k) ** 0.5
        w = jax.random.uniform(kw, (cout, cin, k), jnp.float32, -bound, bound)
        b = jax.random.uniform(kb, (cout,), jnp.float32, -bound, bound)
        params.append((w, b))
    return params


def build_block_operator(w, b, L, pad, stride):
    """Fold Conv1d(pad, stride=1) + MaxPool1d(2) into two dense matmul operators.

    Returns A_even, A_odd of shape (Cin*L, Cout*Lh), a lane-major bias row
    (1, Cout*Lh), and the pooled length Lh.
    """
    Cout, Cin, K = w.shape
    assert stride == 1, "operator construction assumes stride 1"
    Lout = L + 2 * pad - (K - 1)
    Lh = Lout // 2
    m = jnp.arange(L)
    j = jnp.arange(Lh)
    k = jnp.arange(K)
    ops = []
    for p in (0, 1):  # even / odd conv output positions l = 2j + p
        # input index read by tap k at output position l: m = l + k - pad
        tgt = 2 * j[None, None, :] + p + k[:, None, None] - pad       # (K,1,Lh)
        sel = (m[None, :, None] == tgt).astype(w.dtype)               # (K,L,Lh)
        A = jnp.einsum('ock,kmj->cmoj', w, sel)                       # (Cin,L,Cout,Lh)
        ops.append(A.reshape(Cin * L, Cout * Lh))
    b_row = jnp.repeat(b, Lh).reshape(1, Cout * Lh)                   # lane-major bias
    return ops[0], ops[1], b_row, Lh


def build_fused_operators(params):
    """One-time weight re-layout: list of (A_even, A_odd, bias_row) per block."""
    flat_ops = []
    L = windowSize
    for (w, b), pad, stride in zip(params, convPadding, convStride):
        ae, ao, br, Lh = build_block_operator(w, b, L, pad, stride)
        flat_ops += [ae, ao, br]
        L = Lh
    out_features = L * convChannel[-1]
    return flat_ops, out_features


# ---- model forward -------------------------------------------------------------
def tumor_bottle_cnn_forward(x, fused_ops, out_features):
    N = x.shape[0]
    num_blocks = len(fused_ops) // 3
    x2d = x.reshape(N, -1)                   # (N, Cin0*L0); matches nn.Flatten order
    vmem_spec = pl.BlockSpec(memory_space=pltpu.MemorySpace.VMEM)
    return pl.pallas_call(
        make_fused_kernel(num_blocks),
        out_shape=jax.ShapeDtypeStruct((N, out_features), x.dtype),
        in_specs=[vmem_spec] * (1 + 3 * num_blocks),
        out_specs=vmem_spec,
    )(x2d, *fused_ops)


# ---- pure-JAX reference for validation -----------------------------------------
def ref_forward(x, params):
    h = x
    for (w, b), pad, stride in zip(params, convPadding, convStride):
        out = jax.lax.conv_general_dilated(
            h, w, window_strides=(stride,), padding=[(pad, pad)],
            dimension_numbers=('NCH', 'OIH', 'NCH'))
        out = out + b[None, :, None]
        out = jax.lax.reduce_window(out, -jnp.inf, jax.lax.max,
                                    (1, 1, 2), (1, 1, 2), 'VALID')
        h = out
    return h.reshape(h.shape[0], -1)


if __name__ == "__main__":
    key = jax.random.PRNGKey(0)
    key, kx = jax.random.split(key)
    x = jax.random.normal(kx, (BATCH, convChannel[0], windowSize), jnp.float32)
    params = init_params(key)

    fused_ops, out_features = build_fused_operators(params)

    out = tumor_bottle_cnn_forward(x, fused_ops, out_features)
    out = jax.block_until_ready(out)

    expected = jax.block_until_ready(ref_forward(x, params))

    flattenSize = windowSize
    for _ in range(len(convChannel) - 1):
        flattenSize //= 2
    flattenSize *= convChannel[-1]

    assert out.shape == (BATCH, flattenSize), out.shape
    assert jnp.allclose(out, expected, rtol=1e-4, atol=1e-4), (
        float(jnp.max(jnp.abs(out - expected))))
    print("KERNEL_OK")
</pallas_src>

<mosaic_0001>
module attributes {stable_mosaic.version = 11 : i64} {
  func.func @kernel(%arg0: memref<2x64xf32, #tpu.memory_space<vmem>>, %arg1: memref<64x64xf32, #tpu.memory_space<vmem>>, %arg2: memref<64x64xf32, #tpu.memory_space<vmem>>, %arg3: memref<1x64xf32, #tpu.memory_space<vmem>>, %arg4: memref<64x64xf32, #tpu.memory_space<vmem>>, %arg5: memref<64x64xf32, #tpu.memory_space<vmem>>, %arg6: memref<1x64xf32, #tpu.memory_space<vmem>>, %arg7: memref<2x64xf32, #tpu.memory_space<vmem>>) attributes {dimension_semantics = [], scalar_prefetch = 0 : i64, scratch_operands = 0 : i64, tpu.core_type = #tpu.core_type<tc>} {
    %c0 = arith.constant 0 : index
    %c0_0 = arith.constant 0 : index
    %0 = vector.load %arg0[%c0, %c0_0] : memref<2x64xf32, #tpu.memory_space<vmem>>, vector<2x64xf32>
    %c0_1 = arith.constant 0 : index
    %c0_2 = arith.constant 0 : index
    %1 = vector.load %arg1[%c0_1, %c0_2] : memref<64x64xf32, #tpu.memory_space<vmem>>, vector<64x64xf32>
    %c0_3 = arith.constant 0 : index
    %c0_4 = arith.constant 0 : index
    %2 = vector.load %arg2[%c0_3, %c0_4] : memref<64x64xf32, #tpu.memory_space<vmem>>, vector<64x64xf32>
    %c0_5 = arith.constant 0 : index
    %c0_6 = arith.constant 0 : index
    %3 = vector.load %arg3[%c0_5, %c0_6] : memref<1x64xf32, #tpu.memory_space<vmem>>, vector<1x64xf32>
    %cst = arith.constant dense<0.000000e+00> : vector<2x64xf32>
    %4 = tpu.matmul %0, %1, %cst {dimension_numbers = #tpu.dot_dimension_numbers<[1], [0], [0], [1], [0, 0, 1, 1], [], []>} : vector<2x64xf32>, vector<64x64xf32>, vector<2x64xf32> -> vector<2x64xf32>
    %cst_7 = arith.constant dense<0.000000e+00> : vector<2x64xf32>
    %5 = tpu.matmul %0, %2, %cst_7 {dimension_numbers = #tpu.dot_dimension_numbers<[1], [0], [0], [1], [0, 0, 1, 1], [], []>} : vector<2x64xf32>, vector<64x64xf32>, vector<2x64xf32> -> vector<2x64xf32>
    %6 = arith.maximumf %4, %5 : vector<2x64xf32>
    %7 = vector.broadcast %3 : vector<1x64xf32> to vector<2x64xf32>
    %8 = arith.addf %6, %7 : vector<2x64xf32>
    %c0_8 = arith.constant 0 : index
    %c0_9 = arith.constant 0 : index
    %9 = vector.load %arg4[%c0_8, %c0_9] : memref<64x64xf32, #tpu.memory_space<vmem>>, vector<64x64xf32>
    %c0_10 = arith.constant 0 : index
    %c0_11 = arith.constant 0 : index
    %10 = vector.load %arg5[%c0_10, %c0_11] : memref<64x64xf32, #tpu.memory_space<vmem>>, vector<64x64xf32>
    %c0_12 = arith.constant 0 : index
    %c0_13 = arith.constant 0 : index
    %11 = vector.load %arg6[%c0_12, %c0_13] : memref<1x64xf32, #tpu.memory_space<vmem>>, vector<1x64xf32>
    %cst_14 = arith.constant dense<0.000000e+00> : vector<2x64xf32>
    %12 = tpu.matmul %8, %9, %cst_14 {dimension_numbers = #tpu.dot_dimension_numbers<[1], [0], [0], [1], [0, 0, 1, 1], [], []>} : vector<2x64xf32>, vector<64x64xf32>, vector<2x64xf32> -> vector<2x64xf32>
    %cst_15 = arith.constant dense<0.000000e+00> : vector<2x64xf32>
    %13 = tpu.matmul %8, %10, %cst_15 {dimension_numbers = #tpu.dot_dimension_numbers<[1], [0], [0], [1], [0, 0, 1, 1], [], []>} : vector<2x64xf32>, vector<64x64xf32>, vector<2x64xf32> -> vector<2x64xf32>
    %14 = arith.maximumf %12, %13 : vector<2x64xf32>
    %15 = vector.broadcast %11 : vector<1x64xf32> to vector<2x64xf32>
    %16 = arith.addf %14, %15 : vector<2x64xf32>
    %c0_16 = arith.constant 0 : index
    %c0_17 = arith.constant 0 : index
    %17 = vector.load %arg7[%c0_16, %c0_17] : memref<2x64xf32, #tpu.memory_space<vmem>>, vector<2x64xf32>
    tpu.vector_store %arg7[%c0_16, %c0_17], %16 {strides = array<i32>} : memref<2x64xf32, #tpu.memory_space<vmem>>, vector<2x64xf32>,
    return
  }
}

</mosaic_0001>

<llo_original>
// kernel: tpu_custom_call.1
$region0: #{tpu_custom_call.1}
  #allocation0 [shape = 'u32[]', space=smem, size = 0x4, offset = 0x4, fixed_abs, tag = 'smem constant byte address 0x4 - core index']
  #allocation1 [shape = 'u32[144,128]{1,0:T(1,128)}', space=vmem, size = 0x12000, scoped, tag = 'internal scratch']
  %s0 = inlined_call_operand.hbm [shape: f32[2,64], index: 0, kind: input, shape index: {}]
  %s1 = inlined_call_operand.hbm [shape: f32[64,64], index: 1, kind: input, shape index: {}]
  %s2 = inlined_call_operand.hbm [shape: f32[64,64], index: 2, kind: input, shape index: {}]
  %s3 = inlined_call_operand.vmem [shape: f32[1,64], index: 3, kind: input, shape index: {}]
  %s4 = inlined_call_operand.hbm [shape: f32[64,64], index: 4, kind: input, shape index: {}]
  %s5 = inlined_call_operand.hbm [shape: f32[64,64], index: 5, kind: input, shape index: {}]
  %s6 = inlined_call_operand.vmem [shape: f32[1,64], index: 6, kind: input, shape index: {}]
  %s7 = inlined_call_operand.hbm [shape: f32[2,64], index: 7, kind: output, shape index: {}]
  %s8 = sld [smem:[#allocation0]]
  $region58: #{tpu_custom_call.1} parent=0
    _
  %s10 = ssub.s32 1, %s8
  %s11 = scalar_select 0, %s10, %s8
  $region1: #{tpu_custom_call.1} parent=0
    #allocation2 [shape = 'u8[1024]{0}', space=vmem, size = 0x400, scoped, tag = 'input window, operand 0, single buffered']
    #allocation3 [shape = 's32[1]{0}', space=sflag, size = 0x4, scoped, tag = 'scoped memory for tpu_custom_call.1']
    #allocation4 [shape = 's32[1]{0}', space=sflag, size = 0x4, scoped, tag = 'scoped memory for tpu_custom_call.1']
    #allocation5 [shape = 'u8[32768]{0}', space=vmem, size = 0x8000, scoped, tag = 'input window, operand 1, single buffered']
    #allocation6 [shape = 's32[1]{0}', space=sflag, size = 0x4, scoped, tag = 'scoped memory for tpu_custom_call.1']
    #allocation7 [shape = 'u8[32768]{0}', space=vmem, size = 0x8000, scoped, tag = 'input window, operand 2, single buffered']
    #allocation8 [shape = 'u8[32768]{0}', space=vmem, size = 0x8000, scoped, tag = 'input window, operand 4, single buffered']
    #allocation9 [shape = 's32[1]{0}', space=sflag, size = 0x4, scoped, tag = 'scoped memory for tpu_custom_call.1']
    #allocation10 [shape = 'u8[32768]{0}', space=vmem, size = 0x8000, scoped, tag = 'input window, operand 5, single buffered']
    #allocation11 [shape = 'u8[1024]{0}', space=vmem, size = 0x400, scoped, tag = 'output window, operand 0, single buffered']
    %12 = vsyncpa [#allocation3], 0
    %13 = vsyncpa [#allocation6], 0
    %14 = vsyncpa [#allocation9], 0
    %15 = vsyncpa [#allocation4], 0
    // Predicated region
    $region2: #{tpu_custom_call.1} parent=1 // pred_check
      _
    $region3: #{tpu_custom_call.1} parent=1 // pred_check_branch
      %17 = sbr.rel (0) target = $region5
    $region4: #{tpu_custom_call.1} parent=1 // pred_region
      %s19 = ssub.s32 32, 32
      %20 = vsyncadd [#allocation3], %s19
      %s22 = sshll.u32 [#allocation2], 4
      %s23 = int_to_ptr.vmem [resolvable:$true] %s22
      %25 = dma.hbm_to_vmem [thread:$0]  %s0, 32, %s23, [#allocation3]
    $region5: #{tpu_custom_call.1} parent=1 // pred_fallthru
      _
    // Predicated region
    $region6: #{tpu_custom_call.1} parent=1 // pred_check
      _
    $region7: #{tpu_custom_call.1} parent=1 // pred_check_branch
      %27 = sbr.rel (0) target = $region9
    $region8: #{tpu_custom_call.1} parent=1 // pred_region
      %s29 = ssub.s32 1024, 1024
      %30 = vsyncadd [#allocation6], %s29
      %s31 = sshll.u32 [#allocation5], 4
      %s32 = int_to_ptr.vmem [resolvable:$true] %s31
      %37 = dma.hbm_to_vmem [thread:$0]  %s1, 1024, %s32, [#allocation6], 128, 128, 8
    $region9: #{tpu_custom_call.1} parent=1 // pred_fallthru
      _
    // Predicated region
    $region10: #{tpu_custom_call.1} parent=1 // pred_check
      _
    $region11: #{tpu_custom_call.1} parent=1 // pred_check_branch
      %39 = sbr.rel (0) target = $region13
    $region12: #{tpu_custom_call.1} parent=1 // pred_region
      %s41 = ssub.s32 1024, 1024
      %42 = vsyncadd [#allocation6], %s41
      %s43 = sshll.u32 [#allocation7], 4
      %s44 = int_to_ptr.vmem [resolvable:$true] %s43
      %49 = dma.hbm_to_vmem [thread:$0]  %s2, 1024, %s44, [#allocation6], 128, 128, 8
    $region13: #{tpu_custom_call.1} parent=1 // pred_fallthru
      _
    // Predicated region
    $region14: #{tpu_custom_call.1} parent=1 // pred_check
      _
    $region15: #{tpu_custom_call.1} parent=1 // pred_check_branch
      %51 = sbr.rel (0) target = $region17
    $region16: #{tpu_custom_call.1} parent=1 // pred_region
      _
    $region17: #{tpu_custom_call.1} parent=1 // pred_fallthru
      _
    // Predicated region
    $region18: #{tpu_custom_call.1} parent=1 // pred_check
      _
    $region19: #{tpu_custom_call.1} parent=1 // pred_check_branch
      %53 = sbr.rel (0) target = $region21
    $region20: #{tpu_custom_call.1} parent=1 // pred_region
      %s55 = ssub.s32 1024, 1024
      %56 = vsyncadd [#allocation9], %s55
      %s57 = sshll.u32 [#allocation8], 4
      %s58 = int_to_ptr.vmem [resolvable:$true] %s57
      %63 = dma.hbm_to_vmem [thread:$0]  %s4, 1024, %s58, [#allocation9], 128, 128, 8
    $region21: #{tpu_custom_call.1} parent=1 // pred_fallthru
      _
    // Predicated region
    $region22: #{tpu_custom_call.1} parent=1 // pred_check
      _
    $region23: #{tpu_custom_call.1} parent=1 // pred_check_branch
      %65 = sbr.rel (0) target = $region25
    $region24: #{tpu_custom_call.1} parent=1 // pred_region
      %s67 = ssub.s32 1024, 1024
      %68 = vsyncadd [#allocation9], %s67
      %s69 = sshll.u32 [#allocation10], 4
      %s70 = int_to_ptr.vmem [resolvable:$true] %s69
      %75 = dma.hbm_to_vmem [thread:$0]  %s5, 1024, %s70, [#allocation9], 128, 128, 8
    $region25: #{tpu_custom_call.1} parent=1 // pred_fallthru
      _
    // Predicated region
    $region26: #{tpu_custom_call.1} parent=1 // pred_check
      _
    $region27: #{tpu_custom_call.1} parent=1 // pred_check_branch
      %77 = sbr.rel (0) target = $region29
    $region28: #{tpu_custom_call.1} parent=1 // pred_region
      _
    $region29: #{tpu_custom_call.1} parent=1 // pred_fallthru
      _
    // Predicated region
    $region30: #{tpu_custom_call.1} parent=1 // pred_check
      _
    $region31: #{tpu_custom_call.1} parent=1 // pred_check_branch
      %79 = sbr.rel (0) target = $region33
    $region32: #{tpu_custom_call.1} parent=1 // pred_region
      %80 = dma.done [#allocation3], 32
    $region33: #{tpu_custom_call.1} parent=1 // pred_fallthru
      _
    // Predicated region
    $region34: #{tpu_custom_call.1} parent=1 // pred_check
      _
    $region35: #{tpu_custom_call.1} parent=1 // pred_check_branch
      %82 = sbr.rel (0) target = $region37
    $region36: #{tpu_custom_call.1} parent=1 // pred_region
      %83 = dma.done [#allocation6], 1024
    $region37: #{tpu_custom_call.1} parent=1 // pred_fallthru
      _
    // Predicated region
    $region38: #{tpu_custom_call.1} parent=1 // pred_check
      _
    $region39: #{tpu_custom_call.1} parent=1 // pred_check_branch
      %85 = sbr.rel (0) target = $region41
    $region40: #{tpu_custom_call.1} parent=1 // pred_region
      %86 = dma.done [#allocation6], 1024
    $region41: #{tpu_custom_call.1} parent=1 // pred_fallthru
      _
    // Predicated region
    $region42: #{tpu_custom_call.1} parent=1 // pred_check
      _
    $region43: #{tpu_custom_call.1} parent=1 // pred_check_branch
      %88 = sbr.rel (0) target = $region45
    $region44: #{tpu_custom_call.1} parent=1 // pred_region
      %89 = dma.done [#allocation9], 1024
    $region45: #{tpu_custom_call.1} parent=1 // pred_fallthru
      _
    // Predicated region
    $region46: #{tpu_custom_call.1} parent=1 // pred_check
      _
    $region47: #{tpu_custom_call.1} parent=1 // pred_check_branch
      %91 = sbr.rel (0) target = $region49
    $region48: #{tpu_custom_call.1} parent=1 // pred_region
      %92 = dma.done [#allocation9], 1024
    $region49: #{tpu_custom_call.1} parent=1 // pred_fallthru
      _
    %v93 = vld [vmem:[#allocation2] sm:$0x3]
    %v94 = vld [vmem:[#allocation5] sm:$0xff]
    %v95 = vld [vmem:[#allocation5 + $0x8] sm:$0xff]
    %v96 = vld [vmem:[#allocation5 + $0x10] sm:$0xff]
    %v97 = vld [vmem:[#allocation5 + $0x18] sm:$0xff]
    %v98 = vld [vmem:[#allocation5 + $0x20] sm:$0xff]
    %v99 = vld [vmem:[#allocation5 + $0x28] sm:$0xff]
    %v100 = vld [vmem:[#allocation5 + $0x30] sm:$0xff]
    %v101 = vld [vmem:[#allocation5 + $0x38] sm:$0xff]
    %v102 = vld [vmem:[#allocation7] sm:$0xff]
    %v103 = vld [vmem:[#allocation7 + $0x8] sm:$0xff]
    %v104 = vld [vmem:[#allocation7 + $0x10] sm:$0xff]
    %v105 = vld [vmem:[#allocation7 + $0x18] sm:$0xff]
    %v106 = vld [vmem:[#allocation7 + $0x20] sm:$0xff]
    %v107 = vld [vmem:[#allocation7 + $0x28] sm:$0xff]
    %v108 = vld [vmem:[#allocation7 + $0x30] sm:$0xff]
    %v109 = vld [vmem:[#allocation7 + $0x38] sm:$0xff]
    %v110 = vld [vmem:[%s3] sm:$0x1]
    %vm111 = vcmask 523264
    %v113 = vsel %vm111, %v93, 0
    %115 = vmatprep.subr.mxu0 0.0
    %116 = vmatpush1.msra.mxu0 %v94
    %117 = vmatprep.subr.mxu0 0.0
    %118 = vmatpush1.msra.mxu0 %v95
    %119 = vmatprep.subr.mxu0 0.0
    %120 = vmatpush1.msra.mxu0 %v96
    %121 = vmatprep.subr.mxu0 0.0
    %122 = vmatpush1.msra.mxu0 %v97
    %123 = vmatprep.subr.mxu0 0.0
    %124 = vmatpush1.msra.mxu0 %v98
    %125 = vmatprep.subr.mxu0 0.0
    %126 = vmatpush1.msra.mxu0 %v99
    %127 = vmatprep.subr.mxu0 0.0
    %128 = vmatpush1.msra.mxu0 %v100
    %129 = vmatprep.subr.mxu0 0.0
    %130 = vmatpush1.msra.mxu0 %v101
    %131 = vmatprep.subr.mxu0 0.0
    %132 = vmatpush1.msra.mxu0 0.0
    %133 = vmatprep.subr.mxu0 0.0
    %134 = vmatpush1.msra.mxu0 0.0
    %135 = vmatprep.subr.mxu0 0.0
    %136 = vmatpush1.msra.mxu0 0.0
    %137 = vmatprep.subr.mxu0 0.0
    %138 = vmatpush1.msra.mxu0 0.0
    %139 = vmatprep.subr.mxu0 0.0
    %140 = vmatpush1.msra.mxu0 0.0
    %141 = vmatprep.subr.mxu0 0.0
    %142 = vmatpush1.msra.mxu0 0.0
    %143 = vmatprep.subr.mxu0 0.0
    %144 = vmatpush1.msra.mxu0 0.0
    %145 = vmatprep.subr.mxu0 0.0
    %146 = vmatpush1.msra.mxu0 0.0
    %147 = vmatprep.subr.mxu0 0.0
    %148 = vmatpush1.msra.mxu0 0.0
    %149 = vmatprep.subr.mxu0 0.0
    %150 = vmatpush1.msra.mxu0 0.0
    %151 = vmatprep.subr.mxu0 0.0
    %152 = vmatpush1.msra.mxu0 0.0
    %153 = vmatprep.subr.mxu0 0.0
    %154 = vmatpush1.msra.mxu0 0.0
    %155 = vmatprep.subr.mxu0 0.0
    %156 = vmatpush1.msra.mxu0 0.0
    %157 = vmatprep.subr.mxu0 0.0
    %158 = vmatpush1.msra.mxu0 0.0
    %159 = vmatprep.subr.mxu0 0.0
    %160 = vmatpush1.msra.mxu0 0.0
    %161 = vmatprep.subr.mxu0 0.0
    %162 = vmatpush1.msra.mxu0 0.0
    %163 = vmatprep.subr.mxu0 0.0
    %164 = vmatpush1.msra.mxu0 0.0
    %165 = vmatprep.subr.mxu0 0.0
    %166 = vmatpush1.msra.mxu0 0.0
    %167 = vmatprep.subr.mxu0 0.0
    %168 = vmatpush1.msra.mxu0 0.0
    %169 = vmatprep.subr.mxu0 0.0
    %170 = vmatpush1.msra.mxu0 0.0
    %171 = vmatprep.subr.mxu0 0.0
    %172 = vmatpush1.msra.mxu0 0.0
    %173 = vmatprep.subr.mxu0 0.0
    %174 = vmatpush1.msra.mxu0 0.0
    %175 = vmatprep.subr.mxu0 0.0
    %176 = vmatpush1.msra.mxu0 0.0
    %177 = vmatprep.subr.mxu0 0.0
    %178 = vmatpush1.msra.mxu0 0.0
    %179 = vmatprep.mubr.f32.mxu0 0.0
    %180 = vmatmul.mubr.f32.gmra.mrb[0].mxu0 %v113
    %v181 = vpop.f32.mrb[0].mxu0
    %v182 = vadd.f32 0.0, %v181
    %v183 = vpop.f32.mrb[0].mxu0
    %184 = vdwg.mxu0
    %185 = vmatprep.subr.mxu0 0.0
    %186 = vmatpush1.msra.mxu0 %v102
    %187 = vmatprep.subr.mxu0 0.0
    %188 = vmatpush1.msra.mxu0 %v103
    %189 = vmatprep.subr.mxu0 0.0
    %190 = vmatpush1.msra.mxu0 %v104
    %191 = vmatprep.subr.mxu0 0.0
    %192 = vmatpush1.msra.mxu0 %v105
    %193 = vmatprep.subr.mxu0 0.0
    %194 = vmatpush1.msra.mxu0 %v106
    %195 = vmatprep.subr.mxu0 0.0
    %196 = vmatpush1.msra.mxu0 %v107
    %197 = vmatprep.subr.mxu0 0.0
    %198 = vmatpush1.msra.mxu0 %v108
    %199 = vmatprep.subr.mxu0 0.0
    %200 = vmatpush1.msra.mxu0 %v109
    %201 = vmatprep.subr.mxu0 0.0
    %202 = vmatpush1.msra.mxu0 0.0
    %203 = vmatprep.subr.mxu0 0.0
    %204 = vmatpush1.msra.mxu0 0.0
    %205 = vmatprep.subr.mxu0 0.0
    %206 = vmatpush1.msra.mxu0 0.0
    %207 = vmatprep.subr.mxu0 0.0
    %208 = vmatpush1.msra.mxu0 0.0
    %209 = vmatprep.subr.mxu0 0.0
    %210 = vmatpush1.msra.mxu0 0.0
    %211 = vmatprep.subr.mxu0 0.0
    %212 = vmatpush1.msra.mxu0 0.0
    %213 = vmatprep.subr.mxu0 0.0
    %214 = vmatpush1.msra.mxu0 0.0
    %215 = vmatprep.subr.mxu0 0.0
    %216 = vmatpush1.msra.mxu0 0.0
    %217 = vmatprep.subr.mxu0 0.0
    %218 = vmatpush1.msra.mxu0 0.0
    %219 = vmatprep.subr.mxu0 0.0
    %220 = vmatpush1.msra.mxu0 0.0
    %221 = vmatprep.subr.mxu0 0.0
    %222 = vmatpush1.msra.mxu0 0.0
    %223 = vmatprep.subr.mxu0 0.0
    %224 = vmatpush1.msra.mxu0 0.0
    %225 = vmatprep.subr.mxu0 0.0
    %226 = vmatpush1.msra.mxu0 0.0
    %227 = vmatprep.subr.mxu0 0.0
    %228 = vmatpush1.msra.mxu0 0.0
    %229 = vmatprep.subr.mxu0 0.0
    %230 = vmatpush1.msra.mxu0 0.0
    %231 = vmatprep.subr.mxu0 0.0
    %232 = vmatpush1.msra.mxu0 0.0
    %233 = vmatprep.subr.mxu0 0.0
    %234 = vmatpush1.msra.mxu0 0.0
    %235 = vmatprep.subr.mxu0 0.0
    %236 = vmatpush1.msra.mxu0 0.0
    %237 = vmatprep.subr.mxu0 0.0
    %238 = vmatpush1.msra.mxu0 0.0
    %239 = vmatprep.subr.mxu0 0.0
    %240 = vmatpush1.msra.mxu0 0.0
    %241 = vmatprep.subr.mxu0 0.0
    %242 = vmatpush1.msra.mxu0 0.0
    %243 = vmatprep.subr.mxu0 0.0
    %244 = vmatpush1.msra.mxu0 0.0
    %245 = vmatprep.subr.mxu0 0.0
    %246 = vmatpush1.msra.mxu0 0.0
    %247 = vmatprep.subr.mxu0 0.0
    %248 = vmatpush1.msra.mxu0 0.0
    %249 = vmatprep.mubr.f32.mxu0 0.0
    %250 = vmatmul.mubr.f32.gmra.mrb[0].mxu0 %v113
    %v251 = vpop.f32.mrb[0].mxu0
    %v252 = vadd.f32 0.0, %v251
    %v253 = vpop.f32.mrb[0].mxu0
    %254 = vdwg.mxu0
    %v255 = vmax.f32 %v182, %v252
    %v257 = vlaneseq
    %v258 = vshrl.u32 %v257, 7
    %v259 = vsub.s32 0, %v258
    %v260 = vrot.slane %v110, %v259
    %v262 = vadd.f32 %v255, %v260
    %v263 = vld [vmem:[#allocation8] sm:$0xff]
    %v264 = vld [vmem:[#allocation8 + $0x8] sm:$0xff]
    %v265 = vld [vmem:[#allocation8 + $0x10] sm:$0xff]
    %v266 = vld [vmem:[#allocation8 + $0x18] sm:$0xff]
    %v267 = vld [vmem:[#allocation8 + $0x20] sm:$0xff]
    %v268 = vld [vmem:[#allocation8 + $0x28] sm:$0xff]
    %v269 = vld [vmem:[#allocation8 + $0x30] sm:$0xff]
    %v270 = vld [vmem:[#allocation8 + $0x38] sm:$0xff]
    %v271 = vld [vmem:[#allocation10] sm:$0xff]
    %v272 = vld [vmem:[#allocation10 + $0x8] sm:$0xff]
    %v273 = vld [vmem:[#allocation10 + $0x10] sm:$0xff]
    %v274 = vld [vmem:[#allocation10 + $0x18] sm:$0xff]
    %v275 = vld [vmem:[#allocation10 + $0x20] sm:$0xff]
    %v276 = vld [vmem:[#allocation10 + $0x28] sm:$0xff]
    %v277 = vld [vmem:[#allocation10 + $0x30] sm:$0xff]
    %v278 = vld [vmem:[#allocation10 + $0x38] sm:$0xff]
    %v279 = vld [vmem:[%s6] sm:$0x1]
    %v281 = vsel %vm111, %v262, 0
    %283 = vmatprep.subr.mxu0 0.0
    %284 = vmatpush1.msra.mxu0 %v263
    %285 = vmatprep.subr.mxu0 0.0
    %286 = vmatpush1.msra.mxu0 %v264
    %287 = vmatprep.subr.mxu0 0.0
    %288 = vmatpush1.msra.mxu0 %v265
    %289 = vmatprep.subr.mxu0 0.0
    %290 = vmatpush1.msra.mxu0 %v266
    %291 = vmatprep.subr.mxu0 0.0
    %292 = vmatpush1.msra.mxu0 %v267
    %293 = vmatprep.subr.mxu0 0.0
    %294 = vmatpush1.msra.mxu0 %v268
    %295 = vmatprep.subr.mxu0 0.0
    %296 = vmatpush1.msra.mxu0 %v269
    %297 = vmatprep.subr.mxu0 0.0
    %298 = vmatpush1.msra.mxu0 %v270
    %299 = vmatprep.subr.mxu0 0.0
    %300 = vmatpush1.msra.mxu0 0.0
    %301 = vmatprep.subr.mxu0 0.0
    %302 = vmatpush1.msra.mxu0 0.0
    %303 = vmatprep.subr.mxu0 0.0
    %304 = vmatpush1.msra.mxu0 0.0
    %305 = vmatprep.subr.mxu0 0.0
    %306 = vmatpush1.msra.mxu0 0.0
    %307 = vmatprep.subr.mxu0 0.0
    %308 = vmatpush1.msra.mxu0 0.0
    %309 = vmatprep.subr.mxu0 0.0
    %310 = vmatpush1.msra.mxu0 0.0
    %311 = vmatprep.subr.mxu0 0.0
    %312 = vmatpush1.msra.mxu0 0.0
    %313 = vmatprep.subr.mxu0 0.0
    %314 = vmatpush1.msra.mxu0 0.0
    %315 = vmatprep.subr.mxu0 0.0
    %316 = vmatpush1.msra.mxu0 0.0
    %317 = vmatprep.subr.mxu0 0.0
    %318 = vmatpush1.msra.mxu0 0.0
    %319 = vmatprep.subr.mxu0 0.0
    %320 = vmatpush1.msra.mxu0 0.0
    %321 = vmatprep.subr.mxu0 0.0
    %322 = vmatpush1.msra.mxu0 0.0
    %323 = vmatprep.subr.mxu0 0.0
    %324 = vmatpush1.msra.mxu0 0.0
    %325 = vmatprep.subr.mxu0 0.0
    %326 = vmatpush1.msra.mxu0 0.0
    %327 = vmatprep.subr.mxu0 0.0
    %328 = vmatpush1.msra.mxu0 0.0
    %329 = vmatprep.subr.mxu0 0.0
    %330 = vmatpush1.msra.mxu0 0.0
    %331 = vmatprep.subr.mxu0 0.0
    %332 = vmatpush1.msra.mxu0 0.0
    %333 = vmatprep.subr.mxu0 0.0
    %334 = vmatpush1.msra.mxu0 0.0
    %335 = vmatprep.subr.mxu0 0.0
    %336 = vmatpush1.msra.mxu0 0.0
    %337 = vmatprep.subr.mxu0 0.0
    %338 = vmatpush1.msra.mxu0 0.0
    %339 = vmatprep.subr.mxu0 0.0
    %340 = vmatpush1.msra.mxu0 0.0
    %341 = vmatprep.subr.mxu0 0.0
    %342 = vmatpush1.msra.mxu0 0.0
    %343 = vmatprep.subr.mxu0 0.0
    %344 = vmatpush1.msra.mxu0 0.0
    %345 = vmatprep.subr.mxu0 0.0
    %346 = vmatpush1.msra.mxu0 0.0
    %347 = vmatprep.mubr.f32.mxu0 0.0
    %348 = vmatmul.mubr.f32.gmra.mrb[0].mxu0 %v281
    %v349 = vpop.f32.mrb[0].mxu0
    %v350 = vadd.f32 0.0, %v349
    %v351 = vpop.f32.mrb[0].mxu0
    %352 = vdwg.mxu0
    %353 = vmatprep.subr.mxu0 0.0
    %354 = vmatpush1.msra.mxu0 %v271
    %355 = vmatprep.subr.mxu0 0.0
    %356 = vmatpush1.msra.mxu0 %v272
    %357 = vmatprep.subr.mxu0 0.0
    %358 = vmatpush1.msra.mxu0 %v273
    %359 = vmatprep.subr.mxu0 0.0
    %360 = vmatpush1.msra.mxu0 %v274
    %361 = vmatprep.subr.mxu0 0.0
    %362 = vmatpush1.msra.mxu0 %v275
    %363 = vmatprep.subr.mxu0 0.0
    %364 = vmatpush1.msra.mxu0 %v276
    %365 = vmatprep.subr.mxu0 0.0
    %366 = vmatpush1.msra.mxu0 %v277
    %367 = vmatprep.subr.mxu0 0.0
    %368 = vmatpush1.msra.mxu0 %v278
    %369 = vmatprep.subr.mxu0 0.0
    %370 = vmatpush1.msra.mxu0 0.0
    %371 = vmatprep.subr.mxu0 0.0
    %372 = vmatpush1.msra.mxu0 0.0
    %373 = vmatprep.subr.mxu0 0.0
    %374 = vmatpush1.msra.mxu0 0.0
    %375 = vmatprep.subr.mxu0 0.0
    %376 = vmatpush1.msra.mxu0 0.0
    %377 = vmatprep.subr.mxu0 0.0
    %378 = vmatpush1.msra.mxu0 0.0
    %379 = vmatprep.subr.mxu0 0.0
    %380 = vmatpush1.msra.mxu0 0.0
    %381 = vmatprep.subr.mxu0 0.0
    %382 = vmatpush1.msra.mxu0 0.0
    %383 = vmatprep.subr.mxu0 0.0
    %384 = vmatpush1.msra.mxu0 0.0
    %385 = vmatprep.subr.mxu0 0.0
    %386 = vmatpush1.msra.mxu0 0.0
    %387 = vmatprep.subr.mxu0 0.0
    %388 = vmatpush1.msra.mxu0 0.0
    %389 = vmatprep.subr.mxu0 0.0
    %390 = vmatpush1.msra.mxu0 0.0
    %391 = vmatprep.subr.mxu0 0.0
    %392 = vmatpush1.msra.mxu0 0.0
    %393 = vmatprep.subr.mxu0 0.0
    %394 = vmatpush1.msra.mxu0 0.0
    %395 = vmatprep.subr.mxu0 0.0
    %396 = vmatpush1.msra.mxu0 0.0
    %397 = vmatprep.subr.mxu0 0.0
    %398 = vmatpush1.msra.mxu0 0.0
    %399 = vmatprep.subr.mxu0 0.0
    %400 = vmatpush1.msra.mxu0 0.0
    %401 = vmatprep.subr.mxu0 0.0
    %402 = vmatpush1.msra.mxu0 0.0
    %403 = vmatprep.subr.mxu0 0.0
    %404 = vmatpush1.msra.mxu0 0.0
    %405 = vmatprep.subr.mxu0 0.0
    %406 = vmatpush1.msra.mxu0 0.0
    %407 = vmatprep.subr.mxu0 0.0
    %408 = vmatpush1.msra.mxu0 0.0
    %409 = vmatprep.subr.mxu0 0.0
    %410 = vmatpush1.msra.mxu0 0.0
    %411 = vmatprep.subr.mxu0 0.0
    %412 = vmatpush1.msra.mxu0 0.0
    %413 = vmatprep.subr.mxu0 0.0
    %414 = vmatpush1.msra.mxu0 0.0
    %415 = vmatprep.subr.mxu0 0.0
    %416 = vmatpush1.msra.mxu0 0.0
    %417 = vmatprep.mubr.f32.mxu0 0.0
    %418 = vmatmul.mubr.f32.gmra.mrb[0].mxu0 %v281
    %v419 = vpop.f32.mrb[0].mxu0
    %v420 = vadd.f32 0.0, %v419
    %v421 = vpop.f32.mrb[0].mxu0
    %422 = vdwg.mxu0
    %v423 = vmax.f32 %v350, %v420
    %v425 = vlaneseq
    %v426 = vshrl.u32 %v425, 7
    %v427 = vsub.s32 0, %v426
    %v428 = vrot.slane %v279, %v427
    %v430 = vadd.f32 %v423, %v428
    %vm431 = vcmask 517120
    %432 = vst.msk [vmem:[#allocation11] sm:$0x3] %vm431, %v430
    // Predicated region
    $region50: #{tpu_custom_call.1} parent=1 // pred_check
      _
    $region51: #{tpu_custom_call.1} parent=1 // pred_check_branch
      %434 = sbr.rel (0) target = $region53
    $region52: #{tpu_custom_call.1} parent=1 // pred_region
      %s436 = ssub.s32 32, 32
      %437 = vsyncadd [#allocation4], %s436
      %s439 = sshll.u32 [#allocation11], 4
      %s440 = int_to_ptr.vmem [resolvable:$true] %s439
      %442 = dma.vmem_to_hbm [thread:$0]  %s440, 32, %s7, [#allocation4]
    $region53: #{tpu_custom_call.1} parent=1 // pred_fallthru
      _
    // Predicated region
    $region54: #{tpu_custom_call.1} parent=1 // pred_check
      _
    $region55: #{tpu_custom_call.1} parent=1 // pred_check_branch
      %444 = sbr.rel (0) target = $region57
    $region56: #{tpu_custom_call.1} parent=1 // pred_region
      %445 = dma.done [#allocation4], 32
    $region57: #{tpu_custom_call.1} parent=1 // pred_fallthru
      _
    %446 = vsyncpa [#allocation3], 1
    %447 = vsyncpa [#allocation6], 1
    %448 = vsyncpa [#allocation9], 1
    %449 = vsyncpa [#allocation4], 1

</llo_original>
